<compile_context>
chip_gen: v7x
topology: tpu7x:2x2x1
jax: 0.10.0
libtpu: 0.0.40
codegen_flags: <defaults>
</compile_context>

<pallas_src>
import jax
import jax.numpy as jnp
from jax.experimental import pallas as pl
from jax.experimental.pallas import tpu as pltpu


def _round_up(x: int, m: int) -> int:
    return ((x + m - 1) // m) * m


def _vmem_plan():
    """(tile_budget_bytes, vmem_limit_bytes) for the local TPU generation."""
    kind = ""
    try:
        kind = jax.devices()[0].device_kind.lower()
    except Exception:
        pass
    if "v7" in kind:
        # v7x: 64 MiB physical VMEM per TensorCore.
        return 40 * 1024 * 1024, 56 * 1024 * 1024
    if "v2" in kind or "v3" in kind:
        # Old generations: stay under the small default scoped limit.
        return 8 * 1024 * 1024, None
    # v5e / v6e (and default): 128 MiB physical VMEM.
    return 64 * 1024 * 1024, 100 * 1024 * 1024


def _select_plan(M: int, D: int, tile_budget: int, w_bytes: int):
    """Pick (tm, tn).  Prefer full-width resident W (tn == D)."""
    M8 = max(8, _round_up(M, 8))
    tm_candidates = (1024, 512, 256, 128, 64, 32, 16, 8)

    # Path 1: resident full-width W.  Double-buffered footprint:
    #   2 * (x tile f32 + W + bias + out tile f32)
    for tm in tm_candidates:
        tm_c = min(tm, M8)
        fp = 2 * (8 * tm_c * D + w_bytes * D * D + 4 * D)
        if fp <= tile_budget:
            return tm_c, D

    # Path 2: N-tiled W (very large D).  Prefer large tn (>=256-wide MXU
    # passes on v6e/v7x) and large tm to amortize the W re-fetch.
    for tn in (2048, 1792, 1536, 1280, 1024, 768, 512, 384, 256, 128):
        if tn <= D and D % tn == 0:
            for tm in tm_candidates:
                tm_c = min(tm, M8)
                # bf16 x matmul slab + f32 residual tile + W tile + bias + out
                fp = 2 * (2 * tm_c * D + 8 * tm_c * tn + w_bytes * D * tn + 4 * tn)
                if fp <= tile_budget:
                    return tm_c, tn

    # TODO(synk): pad D to a 128-multiple for huge hidden sizes with no
    # 128-aligned divisor; falling back to a full-width W block here.
    return min(256, M8), D


def _residual_resident_kernel(factors_ref, x_ref, w_ref, b_ref, o_ref):
    # factors_ref: SMEM (2,) f32 -> [module_factor, input_factor]
    # x_ref: (tm, D) f32   w_ref: (D, D)   b_ref: (1, D) f32
    module_factor = factors_ref[0]
    input_factor = factors_ref[1]

    x = x_ref[...]                                             # (tm, D) f32
    # Matmul in the weight dtype (bf16 by default) with f32 accumulation.
    y = jnp.dot(x.astype(w_ref.dtype), w_ref[...],
                preferred_element_type=jnp.float32)            # (tm, D) f32
    y = y + b_ref[...]
    o_ref[...] = (y * module_factor + x * input_factor).astype(o_ref.dtype)


def _residual_tiled_kernel(factors_ref, xmm_ref, xres_ref, w_ref, b_ref, o_ref):
    # xmm_ref: (tm, D) matmul-dtype (resident across j)   xres_ref: (tm, tn) f32
    # w_ref: (D, tn)   b_ref: (1, tn) f32
    module_factor = factors_ref[0]
    input_factor = factors_ref[1]

    y = jnp.dot(xmm_ref[...], w_ref[...],
                preferred_element_type=jnp.float32)            # (tm, tn) f32
    y = y + b_ref[...]
    o_ref[...] = (y * module_factor
                  + xres_ref[...] * input_factor).astype(o_ref.dtype)


def residual_connection_linear(x, w, b, module_factor=1.0, input_factor=1.0,
                               *, weight_dtype=jnp.bfloat16,
                               tm=None, force_tn=None):
    """Fused residual Linear: (x @ w + b) * module_factor + x * input_factor.

    x: (B, S, D) float32; w: (D, D); b: (D,).  Returns (B, S, D) float32.

    Precision (explicit, documented): by default the matmul runs on the MXU in
    bfloat16 with float32 accumulation (`weight_dtype=jnp.bfloat16`).  Pass
    `weight_dtype=jnp.float32` (or `None` to keep `w`'s dtype) for full f32.
    The residual term is always taken from the original f32 input, and all
    epilogue math is f32.  Ideally pre-cast/cache the bf16 weight outside the
    forward path (as the demo does) so no per-call cast pass over W is paid.
    """
    B, S, D = x.shape
    M = B * S
    x2 = x.reshape(M, D)

    if weight_dtype is not None and w.dtype != weight_dtype:
        w = w.astype(weight_dtype)
    w_bytes = jnp.dtype(w.dtype).itemsize
    b2 = b.reshape(1, D).astype(jnp.float32)
    factors = jnp.array([module_factor, input_factor], dtype=jnp.float32)

    tile_budget, vmem_limit = _vmem_plan()
    tm_sel, tn_sel = _select_plan(M, D, tile_budget, w_bytes)
    if tm is not None:
        tm_sel = max(8, _round_up(min(tm, _round_up(M, 8)), 8))
    if force_tn is not None:
        tn_sel = force_tn

    n_row = pl.cdiv(M, tm_sel)

    if tn_sel == D:
        # ---- Resident-W path: W DMA'd once, stays in VMEM across all rows.
        cost = pl.CostEstimate(
            flops=2 * M * D * D + 3 * M * D,
            transcendentals=0,
            bytes_accessed=(M * D * 4            # x (f32 in)
                            + D * D * w_bytes    # W (read once, resident)
                            + D * 4              # bias
                            + M * D * 4),        # out (f32)
        )
        out = pl.pallas_call(
            _residual_resident_kernel,
            out_shape=jax.ShapeDtypeStruct((M, D), x.dtype),
            grid_spec=pltpu.PrefetchScalarGridSpec(
                num_scalar_prefetch=1,           # factors -> SMEM
                grid=(n_row,),
                in_specs=[
                    pl.BlockSpec((tm_sel, D), lambda i, _f: (i, 0)),
                    pl.BlockSpec((D, D), lambda i, _f: (0, 0)),   # resident W
                    pl.BlockSpec((1, D), lambda i, _f: (0, 0)),
                ],
                out_specs=pl.BlockSpec((tm_sel, D), lambda i, _f: (i, 0)),
            ),
            compiler_params=pltpu.CompilerParams(
                dimension_semantics=("parallel",),
                vmem_limit_bytes=vmem_limit),
            cost_estimate=cost,
        )(factors, x2, w, b2)
    else:
        # ---- N-tiled path (very large D): bf16 matmul operand passed
        # separately from the f32 residual tile so the cast is not repeated
        # per column tile; x matmul slab stays resident across j.
        tn = tn_sel
        n_col = D // tn
        x_mm = x2.astype(w.dtype)                # cast once in the wrapper
        cost = pl.CostEstimate(
            flops=2 * M * D * D + 3 * M * D,
            transcendentals=0,
            bytes_accessed=(M * D * w_bytes          # x (matmul operand)
                            + M * D * 4              # x residual tiles (f32)
                            + n_row * D * D * w_bytes  # W re-read per row tile
                            + D * 4                  # bias
                            + M * D * 4),            # out (f32)
        )
        out = pl.pallas_call(
            _residual_tiled_kernel,
            out_shape=jax.ShapeDtypeStruct((M, D), x.dtype),
            grid_spec=pltpu.PrefetchScalarGridSpec(
                num_scalar_prefetch=1,
                grid=(n_row, n_col),
                in_specs=[
                    # matmul operand: j-constant index -> resident across j
                    pl.BlockSpec((tm_sel, D), lambda i, j, _f: (i, 0)),
                    # f32 residual tile matching the output tile
                    pl.BlockSpec((tm_sel, tn), lambda i, j, _f: (i, j)),
                    # N-tiled weight
                    pl.BlockSpec((D, tn), lambda i, j, _f: (0, j)),
                    # bias tile
                    pl.BlockSpec((1, tn), lambda i, j, _f: (0, j)),
                ],
                out_specs=pl.BlockSpec((tm_sel, tn), lambda i, j, _f: (i, j)),
            ),
            compiler_params=pltpu.CompilerParams(
                # Never let a megacore shard the tiny column axis.
                dimension_semantics=("parallel", "arbitrary"),
                vmem_limit_bytes=vmem_limit),
            cost_estimate=cost,
        )(factors, x_mm, x2, w, b2)

    return out.reshape(B, S, D)


if __name__ == "__main__":
    def run_case(B, S, D, module_factor, input_factor, key, **kw):
        kx, kweight, kb = jax.random.split(key, 3)
        x = jax.random.normal(kx, (B, S, D), dtype=jnp.float32)
        # Deterministic synthetic "Linear" parameters.
        w = jax.random.normal(kweight, (D, D), dtype=jnp.float32) * (1.0 / jnp.sqrt(D))
        b = jax.random.normal(kb, (D,), dtype=jnp.float32) * 0.01

        # Pre-cast the weight ONCE outside the forward path (hoisted cast).
        w_bf16 = w.astype(jnp.bfloat16)

        out = residual_connection_linear(
            x, w_bf16, b, module_factor, input_factor, **kw)
        out = jax.block_until_ready(out)

        # Reference matching the kernel numerics (bf16 matmul, f32 accumulate,
        # f32 residual).
        y_bf = jnp.dot(x.reshape(-1, D).astype(jnp.bfloat16), w_bf16,
                       preferred_element_type=jnp.float32).reshape(B, S, D) + b
        ref_matched = y_bf * module_factor + x * input_factor
        assert jnp.allclose(out, ref_matched, atol=2e-3, rtol=2e-3), \
            "mismatch vs bf16-matched reference"

        # Loose check against the pure-f32 PyTorch-equivalent reference.
        ref_f32 = (x @ w + b) * module_factor + x * input_factor
        assert jnp.allclose(out, ref_f32, atol=5e-2, rtol=5e-2), \
            "mismatch vs f32 reference"

    key = jax.random.PRNGKey(0)
    k1, k2, k3 = jax.random.split(key, 3)
    # Tiny toy shape: resident-W path, single grid step.
    run_case(B=2, S=8, D=128, module_factor=0.5, input_factor=1.0, key=k1)
    # Ragged row count vs tile (M=400, tm=256 -> 2 row blocks, last one
    # overhangs); no pad/slice copies, resident W.
    run_case(B=2, S=200, D=256, module_factor=0.5, input_factor=1.0, key=k2,
             tm=256)
    # Force the N-tiled path (separate bf16 matmul operand + f32 residual
    # tile, W column tiles) to validate the large-D code path.
    run_case(B=2, S=64, D=256, module_factor=1.0, input_factor=0.5, key=k3,
             force_tn=128)

    print("KERNEL_OK")
</pallas_src>

<mosaic_0001>
module attributes {stable_mosaic.version = 11 : i64} {
  func.func @_residual_resident_kernel(%arg0: i32, %arg1: memref<2xf32, #tpu.memory_space<smem>>, %arg2: memref<16x128xf32, #tpu.memory_space<vmem>>, %arg3: memref<128x128xbf16, #tpu.memory_space<vmem>>, %arg4: memref<1x128xf32, #tpu.memory_space<vmem>>, %arg5: memref<16x128xf32, #tpu.memory_space<vmem>>) attributes {dimension_semantics = [#tpu.dimension_semantics<parallel>], iteration_bounds = array<i64: 1>, scalar_prefetch = 1 : i64, scratch_operands = 0 : i64, tpu.core_type = #tpu.core_type<tc>, window_params = [{transform_indices = @transform_0, window_bounds = array<i64: 16, 128>}, {pipeline_mode = #tpu.pipeline_mode<synchronous>, transform_indices = @transform_1, window_bounds = array<i64: 128, 128>}, {pipeline_mode = #tpu.pipeline_mode<synchronous>, transform_indices = @transform_2, window_bounds = array<i64: 1, 128>}, {transform_indices = @transform_3, window_bounds = array<i64: 16, 128>}]} {
    %c0 = arith.constant 0 : index
    %0 = memref.load %arg1[%c0] : memref<2xf32, #tpu.memory_space<smem>>
    %c1 = arith.constant 1 : index
    %1 = memref.load %arg1[%c1] : memref<2xf32, #tpu.memory_space<smem>>
    %c0_0 = arith.constant 0 : index
    %c0_1 = arith.constant 0 : index
    %2 = vector.load %arg2[%c0_0, %c0_1] : memref<16x128xf32, #tpu.memory_space<vmem>>, vector<16x128xf32>
    %3 = arith.truncf %2 : vector<16x128xf32> to vector<16x128xbf16>
    %c0_2 = arith.constant 0 : index
    %c0_3 = arith.constant 0 : index
    %4 = vector.load %arg3[%c0_2, %c0_3] : memref<128x128xbf16, #tpu.memory_space<vmem>>, vector<128x128xbf16>
    %cst = arith.constant dense<0.000000e+00> : vector<16x128xf32>
    %5 = tpu.matmul %3, %4, %cst {dimension_numbers = #tpu.dot_dimension_numbers<[1], [0], [0], [1], [0, 0, 1, 1], [], []>} : vector<16x128xbf16>, vector<128x128xbf16>, vector<16x128xf32> -> vector<16x128xf32>
    %c0_4 = arith.constant 0 : index
    %c0_5 = arith.constant 0 : index
    %6 = vector.load %arg4[%c0_4, %c0_5] : memref<1x128xf32, #tpu.memory_space<vmem>>, vector<1x128xf32>
    %7 = vector.broadcast %6 : vector<1x128xf32> to vector<16x128xf32>
    %8 = arith.addf %5, %7 : vector<16x128xf32>
    %9 = vector.broadcast %0 : f32 to vector<16x128xf32>
    %10 = arith.mulf %8, %9 : vector<16x128xf32>
    %11 = vector.broadcast %1 : f32 to vector<16x128xf32>
    %12 = arith.mulf %2, %11 : vector<16x128xf32>
    %13 = arith.addf %10, %12 : vector<16x128xf32>
    %c0_6 = arith.constant 0 : index
    %c0_7 = arith.constant 0 : index
    %14 = vector.load %arg5[%c0_6, %c0_7] : memref<16x128xf32, #tpu.memory_space<vmem>>, vector<16x128xf32>
    tpu.vector_store %arg5[%c0_6, %c0_7], %13 {strides = array<i32>} : memref<16x128xf32, #tpu.memory_space<vmem>>, vector<16x128xf32>,
    return
  }
  func.func @transform_0(%arg0: i32, %arg1: memref<2xf32, #tpu.memory_space<smem>>) -> (i32, i32) {
    %c0_i32 = arith.constant 0 : i32
    %c0_i32_0 = arith.constant 0 : i32
    return %arg0, %c0_i32 : i32, i32
  }
  func.func @transform_1(%arg0: i32, %arg1: memref<2xf32, #tpu.memory_space<smem>>) -> (i32, i32) {
    %c0_i32 = arith.constant 0 : i32
    %c0_i32_0 = arith.constant 0 : i32
    %c0_i32_1 = arith.constant 0 : i32
    return %c0_i32, %c0_i32_0 : i32, i32
  }
  func.func @transform_2(%arg0: i32, %arg1: memref<2xf32, #tpu.memory_space<smem>>) -> (i32, i32) {
    %c0_i32 = arith.constant 0 : i32
    %c0_i32_0 = arith.constant 0 : i32
    %c0_i32_1 = arith.constant 0 : i32
    return %c0_i32, %c0_i32_0 : i32, i32
  }
  func.func @transform_3(%arg0: i32, %arg1: memref<2xf32, #tpu.memory_space<smem>>) -> (i32, i32) {
    %c0_i32 = arith.constant 0 : i32
    %c0_i32_0 = arith.constant 0 : i32
    return %arg0, %c0_i32 : i32, i32
  }
}

</mosaic_0001>

<llo_original>
// kernel: tpu_custom_call.1
$region0: #{tpu_custom_call.1}
  #allocation0 [shape = 'u32[]', space=smem, size = 0x4, offset = 0x4, fixed_abs, tag = 'smem constant byte address 0x4 - core index']
  #allocation1 [shape = 'u32[144,128]{1,0:T(1,128)}', space=vmem, size = 0x12000, scoped, tag = 'internal scratch']
  #allocation2 [shape = 's32[1]{0}', space=sflag, size = 0x4, scoped, tag = 'scoped memory for tpu_custom_call.1']
  #allocation3 [shape = 'u8[512]{0}', space=smem, size = 0x200, scoped, tag = 'prefetched SMEM operand 0']
  %s0 = inlined_call_operand.hbm [shape: f32[2], index: 0, kind: input, shape index: {}]
  %s1 = inlined_call_operand.hbm [shape: f32[16,128], index: 1, kind: input, shape index: {}]
  %s2 = inlined_call_operand.hbm [shape: bf16[128,128], index: 2, kind: input, shape index: {}]
  %s3 = inlined_call_operand.hbm [shape: f32[1,128], index: 3, kind: input, shape index: {}]
  %s4 = inlined_call_operand.hbm [shape: f32[16,128], index: 4, kind: output, shape index: {}]
  %s5 = sld [smem:[#allocation0]]
  $region34: #{tpu_custom_call.1} parent=0
    _
  %s7 = ssub.s32 1, %s5
  %s8 = scalar_select 0, %s7, %s5
  %10 = dma.hbm_to_smem %s0, 16, [#allocation3], [#allocation2]
  %11 = dma.done [#allocation2], 16
  %12 = sfence
  $region1: #{tpu_custom_call.1} parent=0
    #allocation4 [shape = 'u8[8192]{0}', space=vmem, size = 0x2000, scoped, tag = 'input window, operand 1, single buffered']
    #allocation5 [shape = 's32[1]{0}', space=sflag, size = 0x4, scoped, tag = 'scoped memory for tpu_custom_call.1']
    #allocation6 [shape = 's32[1]{0}', space=sflag, size = 0x4, scoped, tag = 'scoped memory for tpu_custom_call.1']
    #allocation7 [shape = 'u8[32768]{0}', space=vmem, size = 0x8000, scoped, tag = 'input window, operand 2, single buffered']
    #allocation8 [shape = 's32[1]{0}', space=sflag, size = 0x4, scoped, tag = 'scoped memory for tpu_custom_call.1']
    #allocation9 [shape = 'u8[512]{0}', space=vmem, size = 0x400, scoped, tag = 'input window, operand 3, single buffered']
    #allocation10 [shape = 'u8[8192]{0}', space=vmem, size = 0x2000, scoped, tag = 'output window, operand 0, single buffered']
    %13 = vsyncpa [#allocation5], 0
    %14 = vsyncpa [#allocation8], 0
    %15 = vsyncpa [#allocation6], 0
    // Predicated region
    $region2: #{tpu_custom_call.1} parent=1 // pred_check
      _
    $region3: #{tpu_custom_call.1} parent=1 // pred_check_branch
      %17 = sbr.rel (0) target = $region5
    $region4: #{tpu_custom_call.1} parent=1 // pred_region
      %s19 = ssub.s32 256, 256
      %20 = vsyncadd [#allocation5], %s19
      %s21 = sshll.u32 [#allocation4], 4
      %s22 = int_to_ptr.vmem [resolvable:$true] %s21
      %27 = dma.hbm_to_vmem [thread:$0]  %s1, 256, %s22, [#allocation5], 128, 128, 8
    $region5: #{tpu_custom_call.1} parent=1 // pred_fallthru
      _
    // Predicated region
    $region6: #{tpu_custom_call.1} parent=1 // pred_check
      _
    $region7: #{tpu_custom_call.1} parent=1 // pred_check_branch
      %29 = sbr.rel (0) target = $region9
    $region8: #{tpu_custom_call.1} parent=1 // pred_region
      %s31 = ssub.s32 1024, 1024
      %32 = vsyncadd [#allocation8], %s31
      %s33 = sshll.u32 [#allocation7], 4
      %s34 = int_to_ptr.vmem [resolvable:$true] %s33
      %39 = dma.hbm_to_vmem [thread:$0]  %s2, 1024, %s34, [#allocation8], 64, 64, 4
    $region9: #{tpu_custom_call.1} parent=1 // pred_fallthru
      _
    // Predicated region
    $region10: #{tpu_custom_call.1} parent=1 // pred_check
      _
    $region11: #{tpu_custom_call.1} parent=1 // pred_check_branch
      %41 = sbr.rel (0) target = $region13
    $region12: #{tpu_custom_call.1} parent=1 // pred_region
      %s43 = ssub.s32 16, 16
      %44 = vsyncadd [#allocation8], %s43
      %s46 = sshll.u32 [#allocation9], 4
      %s47 = int_to_ptr.vmem [resolvable:$true] %s46
      %49 = dma.hbm_to_vmem [thread:$0]  %s3, 16, %s47, [#allocation8]
    $region13: #{tpu_custom_call.1} parent=1 // pred_fallthru
      _
    // Predicated region
    $region14: #{tpu_custom_call.1} parent=1 // pred_check
      _
    $region15: #{tpu_custom_call.1} parent=1 // pred_check_branch
      %51 = sbr.rel (0) target = $region17
    $region16: #{tpu_custom_call.1} parent=1 // pred_region
      %52 = dma.done [#allocation5], 256
    $region17: #{tpu_custom_call.1} parent=1 // pred_fallthru
      _
    // Predicated region
    $region18: #{tpu_custom_call.1} parent=1 // pred_check
      _
    $region19: #{tpu_custom_call.1} parent=1 // pred_check_branch
      %54 = sbr.rel (0) target = $region21
    $region20: #{tpu_custom_call.1} parent=1 // pred_region
      %55 = dma.done [#allocation8], 1024
    $region21: #{tpu_custom_call.1} parent=1 // pred_fallthru
      _
    // Predicated region
    $region22: #{tpu_custom_call.1} parent=1 // pred_check
      _
    $region23: #{tpu_custom_call.1} parent=1 // pred_check_branch
      %57 = sbr.rel (0) target = $region25
    $region24: #{tpu_custom_call.1} parent=1 // pred_region
      %58 = dma.done [#allocation8], 16
    $region25: #{tpu_custom_call.1} parent=1 // pred_fallthru
      _
    %s60 = sld [smem:[#allocation3]]
    %s61 = sld [smem:[#allocation3 + $0x1]]
    %v62 = vld [vmem:[#allocation4] sm:$0xff]
    %v63 = vld [vmem:[#allocation4 + $0x8] sm:$0xff]
    %v64 = vpack.c.bf16 %v63, %v62
    %v65 = vld [vmem:[#allocation7] sm:$0xf]
    %v66 = vld [vmem:[#allocation7 + $0x4] sm:$0xf]
    %v67 = vld [vmem:[#allocation7 + $0x8] sm:$0xf]
    %v68 = vld [vmem:[#allocation7 + $0xc] sm:$0xf]
    %v69 = vld [vmem:[#allocation7 + $0x10] sm:$0xf]
    %v70 = vld [vmem:[#allocation7 + $0x14] sm:$0xf]
    %v71 = vld [vmem:[#allocation7 + $0x18] sm:$0xf]
    %v72 = vld [vmem:[#allocation7 + $0x1c] sm:$0xf]
    %v73 = vld [vmem:[#allocation7 + $0x20] sm:$0xf]
    %v74 = vld [vmem:[#allocation7 + $0x24] sm:$0xf]
    %v75 = vld [vmem:[#allocation7 + $0x28] sm:$0xf]
    %v76 = vld [vmem:[#allocation7 + $0x2c] sm:$0xf]
    %v77 = vld [vmem:[#allocation7 + $0x30] sm:$0xf]
    %v78 = vld [vmem:[#allocation7 + $0x34] sm:$0xf]
    %v79 = vld [vmem:[#allocation7 + $0x38] sm:$0xf]
    %v80 = vld [vmem:[#allocation7 + $0x3c] sm:$0xf]
    %v81 = vld [vmem:[#allocation9] sm:$0x1]
    %v83 = vlaneseq
    %v84 = vshrl.u32 %v83, 7
    %v85 = vsub.s32 0, %v84
    %v86 = vrot.slane %v81, %v85
    %v104 = vunpack.c.l.b16 %v65
    %v105 = vunpack.c.l.b16 %v66
    %v106 = vunpack.c.l.b16 %v67
    %v107 = vunpack.c.l.b16 %v68
    %v108 = vunpack.c.l.b16 %v69
    %v109 = vunpack.c.l.b16 %v70
    %v110 = vunpack.c.l.b16 %v71
    %v111 = vunpack.c.l.b16 %v72
    %v112 = vunpack.c.l.b16 %v73
    %v113 = vunpack.c.l.b16 %v74
    %v114 = vunpack.c.l.b16 %v75
    %v115 = vunpack.c.l.b16 %v76
    %v116 = vunpack.c.l.b16 %v77
    %v117 = vunpack.c.l.b16 %v78
    %v118 = vunpack.c.l.b16 %v79
    %v119 = vunpack.c.l.b16 %v80
    %v120 = vpack.c.b16 %v105, %v104
    %v121 = vpack.c.b16 %v107, %v106
    %v122 = vpack.c.b16 %v109, %v108
    %v123 = vpack.c.b16 %v111, %v110
    %v124 = vpack.c.b16 %v113, %v112
    %v125 = vpack.c.b16 %v115, %v114
    %v126 = vpack.c.b16 %v117, %v116
    %v127 = vpack.c.b16 %v119, %v118
    %136 = vmatprep.subr.bf16.mxu0 0
    %137 = vmatpush1.bf16.msra.mxu0 %v120
    %138 = vmatprep.subr.bf16.mxu0 0
    %139 = vmatpush1.bf16.msra.mxu0 %v121
    %140 = vmatprep.subr.bf16.mxu0 0
    %141 = vmatpush1.bf16.msra.mxu0 %v122
    %142 = vmatprep.subr.bf16.mxu0 0
    %143 = vmatpush1.bf16.msra.mxu0 %v123
    %144 = vmatprep.subr.bf16.mxu0 0
    %145 = vmatpush1.bf16.msra.mxu0 %v124
    %146 = vmatprep.subr.bf16.mxu0 0
    %147 = vmatpush1.bf16.msra.mxu0 %v125
    %148 = vmatprep.subr.bf16.mxu0 0
    %149 = vmatpush1.bf16.msra.mxu0 %v126
    %150 = vmatprep.subr.bf16.mxu0 0
    %151 = vmatpush1.bf16.msra.mxu0 %v127
    %152 = vmatprep.subr.bf16.mxu0 0
    %153 = vmatpush1.bf16.msra.mxu0 0
    %154 = vmatprep.subr.bf16.mxu0 0
    %155 = vmatpush1.bf16.msra.mxu0 0
    %156 = vmatprep.subr.bf16.mxu0 0
    %157 = vmatpush1.bf16.msra.mxu0 0
    %158 = vmatprep.subr.bf16.mxu0 0
    %159 = vmatpush1.bf16.msra.mxu0 0
    %160 = vmatprep.subr.bf16.mxu0 0
    %161 = vmatpush1.bf16.msra.mxu0 0
    %162 = vmatprep.subr.bf16.mxu0 0
    %163 = vmatpush1.bf16.msra.mxu0 0
    %164 = vmatprep.subr.bf16.mxu0 0
    %165 = vmatpush1.bf16.msra.mxu0 0
    %166 = vmatprep.subr.bf16.mxu0 0
    %167 = vmatpush1.bf16.msra.mxu0 0
    %168 = vmatprep.mubr.bf16.mxu0 0
    %169 = vmatmul.mubr.bf16.gmra.mrb[0].mxu0 %v64
    %v170 = vpop.f32.mrb[0].mxu0
    %v171 = vadd.f32 %v86, %v170
    %v172 = vpop.f32.mrb[0].mxu0
    %v173 = vpop.f32.mrb[0].mxu0
    %v174 = vadd.f32 %v86, %v173
    %v175 = vpop.f32.mrb[0].mxu0
    %176 = vdwg.mxu0
    %v177 = vstv %s60
    %v178 = vmul.f32 %v171, %v177
    %v179 = vmul.f32 %v174, %v177
    %v180 = vstv %s61
    %v181 = vmul.f32 %v62, %v180
    %v182 = vmul.f32 %v63, %v180
    %v183 = vadd.f32 %v178, %v181
    %v184 = vadd.f32 %v179, %v182
    %185 = vst [vmem:[#allocation10] sm:$0xff] %v183
    %186 = vst [vmem:[#allocation10 + $0x8] sm:$0xff] %v184
    // Predicated region
    $region26: #{tpu_custom_call.1} parent=1 // pred_check
      _
    $region27: #{tpu_custom_call.1} parent=1 // pred_check_branch
      %188 = sbr.rel (0) target = $region29
    $region28: #{tpu_custom_call.1} parent=1 // pred_region
      %s190 = ssub.s32 256, 256
      %191 = vsyncadd [#allocation6], %s190
      %s192 = sshll.u32 [#allocation10], 4
      %s193 = int_to_ptr.vmem [resolvable:$true] %s192
      %198 = dma.vmem_to_hbm [thread:$0]  %s193, 256, %s4, [#allocation6], 128, 128, 8
    $region29: #{tpu_custom_call.1} parent=1 // pred_fallthru
      _
    // Predicated region
    $region30: #{tpu_custom_call.1} parent=1 // pred_check
      _
    $region31: #{tpu_custom_call.1} parent=1 // pred_check_branch
      %200 = sbr.rel (0) target = $region33
    $region32: #{tpu_custom_call.1} parent=1 // pred_region
      %201 = dma.done [#allocation6], 256
    $region33: #{tpu_custom_call.1} parent=1 // pred_fallthru
      _
    %202 = vsyncpa [#allocation5], 1
    %203 = vsyncpa [#allocation8], 1
    %204 = vsyncpa [#allocation6], 1

</llo_original>
